<compile_context>
chip_gen: v7x
topology: tpu7x:2x2x1
jax: 0.10.0
libtpu: 0.0.40
codegen_flags: <defaults>
</compile_context>

<pallas_src>
import jax
import jax.numpy as jnp
from jax import lax
from jax.experimental import pallas as pl
from jax.experimental.pallas import tpu as pltpu


_INV_SQRT2 = 0.7071067811865476


def _head_kernel(feat_ref, w1_ref, b1_ref, w2_ref, b2_ref, out_ref):
    # feat_ref: [TILE_B, H]  (CLS token tile)
    # w1_ref:   [H, H]    b1_ref: [1, H]
    # w2_ref:   [H, Lp]   b2_ref: [1, Lp]
    # out_ref:  [TILE_B, Lp]
    x = feat_ref[...]                                   # native dtype (bf16/f32)
    # dropout is identity at inference time
    h = jnp.dot(x, w1_ref[...], preferred_element_type=jnp.float32)
    h = h + b1_ref[...].astype(jnp.float32)
    # exact gelu: 0.5 * h * (1 + erf(h / sqrt(2)))   (f32 accumulator)
    h = 0.5 * h * (1.0 + lax.erf(h * _INV_SQRT2))
    # second dropout is also identity at inference time
    h = h.astype(w2_ref.dtype)                          # narrow-in / f32-acc on MXU
    out = jnp.dot(h, w2_ref[...], preferred_element_type=jnp.float32)
    out = out + b2_ref[...].astype(jnp.float32)
    out_ref[...] = out.astype(out_ref.dtype)


def _round_up(x, m):
    return ((x + m - 1) // m) * m


def _vmem_cap_bytes():
    """Physical VMEM minus headroom for Mosaic internal scratch/semaphores."""
    try:
        phys = int(pltpu.get_tpu_info().vmem_capacity_bytes)
    except Exception:
        phys = 64 << 20            # conservative (v7x-sized) fallback
    return max(phys - (8 << 20), 16 << 20)


def electra_classification_head(features, w_dense, b_dense, w_out, b_out, *, tile_b=512):
    """features: [B, S, H]; w_dense: [H, H]; b_dense: [H];
    w_out: [H, L]; b_out: [L]  ->  logits [B, L] (features dtype)."""
    B, S, H = features.shape
    L = w_out.shape[1]
    f_dt = features.dtype
    f_bytes = jnp.dtype(f_dt).itemsize
    w_bytes = jnp.dtype(w_dense.dtype).itemsize

    # Lane-dense label width (padded columns are zero; sliced off at the end).
    # For best perf, pad the out_proj params once at parameter-prep time.
    Lp = _round_up(max(L, 1), 128)
    if Lp != L:
        w_out_p = jnp.pad(w_out, ((0, 0), (0, Lp - L)))
        b_out_p = jnp.pad(b_out, (0, Lp - L))
    else:
        w_out_p, b_out_p = w_out, b_out
    b_dense2 = b_dense.reshape(1, H)
    b_out2 = b_out_p.reshape(1, Lp)

    # ---- batch tile selection ----------------------------------------------
    sub = {4: 8, 2: 16, 1: 32}.get(f_bytes, 8)      # sublane pack for the dtype
    tile_b_eff = min(tile_b, B)
    if B >= 256:
        # Keep >= 2 grid steps so the "parallel" batch axis can shard over the
        # two TensorCores on v7x (one extra step is noise on v5e/v6e).
        tile_b_eff = min(tile_b_eff, _round_up(pl.cdiv(B, 2), sub))
    if tile_b_eff < B:
        # Multi-tile grid: batch block must be sublane-pack aligned so the
        # (8,128) block rule holds and output stores stay unmasked.
        tile_b_eff = max((tile_b_eff // sub) * sub, sub)
    grid = (pl.cdiv(B, tile_b_eff),)

    # ---- VMEM budget (generation-aware) ------------------------------------
    vmem_needed = (
        3 * tile_b_eff * H * f_bytes              # CLS tiles (<=3-deep pipeline)
        + (H * H + H * Lp + H + Lp) * w_bytes     # single-buffered weights + biases
        + 2 * tile_b_eff * Lp * f_bytes           # output tiles (double-buffered)
    )
    vmem_limit = int(min(max(2 * vmem_needed, 8 << 20), _vmem_cap_bytes()))

    cost = pl.CostEstimate(
        flops=2 * B * H * (H + Lp),
        transcendentals=B * H,
        bytes_accessed=(B * H * f_bytes
                        + (H * H + H * Lp + H + Lp) * w_bytes
                        + B * Lp * f_bytes),
    )

    # ---- features input: strided CLS fetch vs wrapper slice ----------------
    use_strided_cls = (H * f_bytes >= 512) and (S > 1)
    if use_strided_cls:
        feat_in = features            # DMA only rows [:, 0, :] via Squeezed spec
    else:
        feat_in = features[:, 0, :]   # tiny H: strided DMA would be descriptor-bound

    def build(tuned):
        wkw = {"pipeline_mode": pl.Buffered(1)} if tuned else {}
        fkw = {"pipeline_mode": pl.Buffered(3)} if tuned else {}
        if use_strided_cls:
            feat_spec = pl.BlockSpec(
                (tile_b_eff, pl.Squeezed(), H), lambda b: (b, 0, 0), **fkw)
        else:
            feat_spec = pl.BlockSpec((tile_b_eff, H), lambda b: (b, 0), **fkw)
        in_specs = [
            feat_spec,
            pl.BlockSpec((H, H), lambda b: (0, 0), **wkw),    # w_dense (resident)
            pl.BlockSpec((1, H), lambda b: (0, 0), **wkw),    # b_dense (resident)
            pl.BlockSpec((H, Lp), lambda b: (0, 0), **wkw),   # w_out   (resident)
            pl.BlockSpec((1, Lp), lambda b: (0, 0), **wkw),   # b_out   (resident)
        ]
        return pl.pallas_call(
            _head_kernel,
            out_shape=jax.ShapeDtypeStruct((B, Lp), f_dt),
            grid=grid,
            in_specs=in_specs,
            out_specs=pl.BlockSpec((tile_b_eff, Lp), lambda b: (b, 0)),
            compiler_params=pltpu.CompilerParams(
                dimension_semantics=("parallel",),
                vmem_limit_bytes=vmem_limit,
            ),
            cost_estimate=cost,
        )

    args = (feat_in, w_dense, b_dense2, w_out_p, b_out2)
    try:
        out = build(tuned=True)(*args)
    except Exception:
        # Fallback if this Pallas build rejects BlockSpec pipeline_mode hints.
        out = build(tuned=False)(*args)

    return out[:, :L]


if __name__ == "__main__":
    # Small config consistent with the module's forward:
    # batch=2, seq=8, hidden=32, num_labels=4
    B, S, H, L = 2, 8, 32, 4

    key = jax.random.PRNGKey(0)
    k_feat, k_w1, k_b1, k_w2, k_b2 = jax.random.split(key, 5)

    features = jax.random.normal(k_feat, (B, S, H), dtype=jnp.float32)
    # deterministic "Linear" params (stored as [in, out] so kernel does x @ W + b)
    w_dense = jax.random.normal(k_w1, (H, H), dtype=jnp.float32) * 0.02
    b_dense = jax.random.normal(k_b1, (H,), dtype=jnp.float32) * 0.02
    w_out = jax.random.normal(k_w2, (H, L), dtype=jnp.float32) * 0.02
    b_out = jax.random.normal(k_b2, (L,), dtype=jnp.float32) * 0.02

    logits = electra_classification_head(features, w_dense, b_dense, w_out, b_out)
    logits = jax.block_until_ready(logits)

    # Pure-JAX reference (same math) to make sure the kernel is sane.
    x = features[:, 0, :]
    h = x @ w_dense + b_dense
    h = 0.5 * h * (1.0 + lax.erf(h / jnp.sqrt(2.0)))
    ref = h @ w_out + b_out
    assert logits.shape == (B, L)
    assert jnp.allclose(logits, ref, atol=1e-5, rtol=1e-5), "mismatch vs reference"

    print("KERNEL_OK")
</pallas_src>

<mosaic_0001>
module attributes {stable_mosaic.version = 11 : i64} {
  func.func @_head_kernel(%arg0: i32, %arg1: memref<2x32xf32, #tpu.memory_space<vmem>>, %arg2: memref<32x32xf32, #tpu.memory_space<vmem>>, %arg3: memref<1x32xf32, #tpu.memory_space<vmem>>, %arg4: memref<32x128xf32, #tpu.memory_space<vmem>>, %arg5: memref<1x128xf32, #tpu.memory_space<vmem>>, %arg6: memref<2x128xf32, #tpu.memory_space<vmem>>) attributes {dimension_semantics = [#tpu.dimension_semantics<parallel>], iteration_bounds = array<i64: 1>, scalar_prefetch = 0 : i64, scratch_operands = 0 : i64, tpu.core_type = #tpu.core_type<tc>, window_params = [{transform_indices = @transform_0, window_bounds = array<i64: 2, 32>}, {pipeline_mode = #tpu.pipeline_mode<synchronous>, transform_indices = @transform_1, window_bounds = array<i64: 32, 32>}, {pipeline_mode = #tpu.pipeline_mode<synchronous>, transform_indices = @transform_2, window_bounds = array<i64: 1, 32>}, {pipeline_mode = #tpu.pipeline_mode<synchronous>, transform_indices = @transform_3, window_bounds = array<i64: 32, 128>}, {pipeline_mode = #tpu.pipeline_mode<synchronous>, transform_indices = @transform_4, window_bounds = array<i64: 1, 128>}, {transform_indices = @transform_5, window_bounds = array<i64: 2, 128>}]} {
    %c0 = arith.constant 0 : index
    %c0_0 = arith.constant 0 : index
    %0 = vector.load %arg1[%c0, %c0_0] : memref<2x32xf32, #tpu.memory_space<vmem>>, vector<2x32xf32>
    %c0_1 = arith.constant 0 : index
    %c0_2 = arith.constant 0 : index
    %1 = vector.load %arg2[%c0_1, %c0_2] : memref<32x32xf32, #tpu.memory_space<vmem>>, vector<32x32xf32>
    %cst = arith.constant dense<0.000000e+00> : vector<2x32xf32>
    %2 = tpu.matmul %0, %1, %cst {dimension_numbers = #tpu.dot_dimension_numbers<[1], [0], [0], [1], [0, 0, 1, 1], [], []>} : vector<2x32xf32>, vector<32x32xf32>, vector<2x32xf32> -> vector<2x32xf32>
    %c0_3 = arith.constant 0 : index
    %c0_4 = arith.constant 0 : index
    %3 = vector.load %arg3[%c0_3, %c0_4] : memref<1x32xf32, #tpu.memory_space<vmem>>, vector<1x32xf32>
    %4 = vector.broadcast %3 : vector<1x32xf32> to vector<2x32xf32>
    %5 = arith.addf %2, %4 : vector<2x32xf32>
    %cst_5 = arith.constant 5.000000e-01 : f32
    %6 = vector.broadcast %cst_5 : f32 to vector<2x32xf32>
    %7 = arith.mulf %6, %5 : vector<2x32xf32>
    %cst_6 = arith.constant 0.707106769 : f32
    %8 = vector.broadcast %cst_6 : f32 to vector<2x32xf32>
    %9 = arith.mulf %5, %8 : vector<2x32xf32>
    %10 = math.erf %9 : vector<2x32xf32>
    %cst_7 = arith.constant 1.000000e+00 : f32
    %11 = vector.broadcast %cst_7 : f32 to vector<2x32xf32>
    %12 = arith.addf %11, %10 : vector<2x32xf32>
    %13 = arith.mulf %7, %12 : vector<2x32xf32>
    %c0_8 = arith.constant 0 : index
    %c0_9 = arith.constant 0 : index
    %14 = vector.load %arg4[%c0_8, %c0_9] : memref<32x128xf32, #tpu.memory_space<vmem>>, vector<32x128xf32>
    %cst_10 = arith.constant dense<0.000000e+00> : vector<2x128xf32>
    %15 = tpu.matmul %13, %14, %cst_10 {dimension_numbers = #tpu.dot_dimension_numbers<[1], [0], [0], [1], [0, 0, 1, 1], [], []>} : vector<2x32xf32>, vector<32x128xf32>, vector<2x128xf32> -> vector<2x128xf32>
    %c0_11 = arith.constant 0 : index
    %c0_12 = arith.constant 0 : index
    %16 = vector.load %arg5[%c0_11, %c0_12] : memref<1x128xf32, #tpu.memory_space<vmem>>, vector<1x128xf32>
    %17 = vector.broadcast %16 : vector<1x128xf32> to vector<2x128xf32>
    %18 = arith.addf %15, %17 : vector<2x128xf32>
    %c0_13 = arith.constant 0 : index
    %c0_14 = arith.constant 0 : index
    %19 = vector.load %arg6[%c0_13, %c0_14] : memref<2x128xf32, #tpu.memory_space<vmem>>, vector<2x128xf32>
    tpu.vector_store %arg6[%c0_13, %c0_14], %18 {strides = array<i32>} : memref<2x128xf32, #tpu.memory_space<vmem>>, vector<2x128xf32>,
    return
  }
  func.func @transform_0(%arg0: i32) -> (i32, i32) {
    %c0_i32 = arith.constant 0 : i32
    %c0_i32_0 = arith.constant 0 : i32
    return %arg0, %c0_i32 : i32, i32
  }
  func.func @transform_1(%arg0: i32) -> (i32, i32) {
    %c0_i32 = arith.constant 0 : i32
    %c0_i32_0 = arith.constant 0 : i32
    %c0_i32_1 = arith.constant 0 : i32
    return %c0_i32, %c0_i32_0 : i32, i32
  }
  func.func @transform_2(%arg0: i32) -> (i32, i32) {
    %c0_i32 = arith.constant 0 : i32
    %c0_i32_0 = arith.constant 0 : i32
    %c0_i32_1 = arith.constant 0 : i32
    return %c0_i32, %c0_i32_0 : i32, i32
  }
  func.func @transform_3(%arg0: i32) -> (i32, i32) {
    %c0_i32 = arith.constant 0 : i32
    %c0_i32_0 = arith.constant 0 : i32
    %c0_i32_1 = arith.constant 0 : i32
    return %c0_i32, %c0_i32_0 : i32, i32
  }
  func.func @transform_4(%arg0: i32) -> (i32, i32) {
    %c0_i32 = arith.constant 0 : i32
    %c0_i32_0 = arith.constant 0 : i32
    %c0_i32_1 = arith.constant 0 : i32
    return %c0_i32, %c0_i32_0 : i32, i32
  }
  func.func @transform_5(%arg0: i32) -> (i32, i32) {
    %c0_i32 = arith.constant 0 : i32
    %c0_i32_0 = arith.constant 0 : i32
    return %arg0, %c0_i32 : i32, i32
  }
}

</mosaic_0001>

<llo_original>
// kernel: tpu_custom_call.1
$region0: #{tpu_custom_call.1}
  #allocation0 [shape = 'u32[]', space=smem, size = 0x4, offset = 0x4, fixed_abs, tag = 'smem constant byte address 0x4 - core index']
  #allocation1 [shape = 'u32[144,128]{1,0:T(1,128)}', space=vmem, size = 0x12000, scoped, tag = 'internal scratch']
  %s0 = inlined_call_operand.hbm [shape: f32[2,32], index: 0, kind: input, shape index: {}]
  %s1 = inlined_call_operand.hbm [shape: f32[32,32], index: 1, kind: input, shape index: {}]
  %s2 = inlined_call_operand.vmem [shape: f32[1,32], index: 2, kind: input, shape index: {}]
  %s3 = inlined_call_operand.hbm [shape: f32[32,128], index: 3, kind: input, shape index: {}]
  %s4 = inlined_call_operand.vmem [shape: f32[1,128], index: 4, kind: input, shape index: {}]
  %s5 = inlined_call_operand.hbm [shape: f32[2,128], index: 5, kind: output, shape index: {}]
  %s6 = sld [smem:[#allocation0]]
  $region42: #{tpu_custom_call.1} parent=0
    _
  %s8 = ssub.s32 1, %s6
  %s9 = scalar_select 0, %s8, %s6
  $region1: #{tpu_custom_call.1} parent=0
    #allocation2 [shape = 'u8[1024]{0}', space=vmem, size = 0x400, scoped, tag = 'input window, operand 0, single buffered']
    #allocation3 [shape = 's32[1]{0}', space=sflag, size = 0x4, scoped, tag = 'scoped memory for tpu_custom_call.1']
    #allocation4 [shape = 's32[1]{0}', space=sflag, size = 0x4, scoped, tag = 'scoped memory for tpu_custom_call.1']
    #allocation5 [shape = 'u8[16384]{0}', space=vmem, size = 0x4000, scoped, tag = 'input window, operand 1, single buffered']
    #allocation6 [shape = 's32[1]{0}', space=sflag, size = 0x4, scoped, tag = 'scoped memory for tpu_custom_call.1']
    #allocation7 [shape = 'u8[16384]{0}', space=vmem, size = 0x4000, scoped, tag = 'input window, operand 3, single buffered']
    #allocation8 [shape = 'u8[1024]{0}', space=vmem, size = 0x400, scoped, tag = 'output window, operand 0, single buffered']
    %10 = vsyncpa [#allocation3], 0
    %11 = vsyncpa [#allocation6], 0
    %12 = vsyncpa [#allocation4], 0
    // Predicated region
    $region2: #{tpu_custom_call.1} parent=1 // pred_check
      _
    $region3: #{tpu_custom_call.1} parent=1 // pred_check_branch
      %14 = sbr.rel (0) target = $region5
    $region4: #{tpu_custom_call.1} parent=1 // pred_region
      %s16 = ssub.s32 32, 32
      %17 = vsyncadd [#allocation3], %s16
      %s19 = sshll.u32 [#allocation2], 4
      %s20 = int_to_ptr.vmem [resolvable:$true] %s19
      %22 = dma.hbm_to_vmem [thread:$0]  %s0, 32, %s20, [#allocation3]
    $region5: #{tpu_custom_call.1} parent=1 // pred_fallthru
      _
    // Predicated region
    $region6: #{tpu_custom_call.1} parent=1 // pred_check
      _
    $region7: #{tpu_custom_call.1} parent=1 // pred_check_branch
      %24 = sbr.rel (0) target = $region9
    $region8: #{tpu_custom_call.1} parent=1 // pred_region
      %s26 = ssub.s32 512, 512
      %27 = vsyncadd [#allocation6], %s26
      %s28 = sshll.u32 [#allocation5], 4
      %s29 = int_to_ptr.vmem [resolvable:$true] %s28
      %34 = dma.hbm_to_vmem [thread:$0]  %s1, 512, %s29, [#allocation6], 128, 128, 8
    $region9: #{tpu_custom_call.1} parent=1 // pred_fallthru
      _
    // Predicated region
    $region10: #{tpu_custom_call.1} parent=1 // pred_check
      _
    $region11: #{tpu_custom_call.1} parent=1 // pred_check_branch
      %36 = sbr.rel (0) target = $region13
    $region12: #{tpu_custom_call.1} parent=1 // pred_region
      _
    $region13: #{tpu_custom_call.1} parent=1 // pred_fallthru
      _
    // Predicated region
    $region14: #{tpu_custom_call.1} parent=1 // pred_check
      _
    $region15: #{tpu_custom_call.1} parent=1 // pred_check_branch
      %38 = sbr.rel (0) target = $region17
    $region16: #{tpu_custom_call.1} parent=1 // pred_region
      %s40 = ssub.s32 512, 512
      %41 = vsyncadd [#allocation6], %s40
      %s42 = sshll.u32 [#allocation7], 4
      %s43 = int_to_ptr.vmem [resolvable:$true] %s42
      %48 = dma.hbm_to_vmem [thread:$0]  %s3, 512, %s43, [#allocation6], 128, 128, 8
    $region17: #{tpu_custom_call.1} parent=1 // pred_fallthru
      _
    // Predicated region
    $region18: #{tpu_custom_call.1} parent=1 // pred_check
      _
    $region19: #{tpu_custom_call.1} parent=1 // pred_check_branch
      %50 = sbr.rel (0) target = $region21
    $region20: #{tpu_custom_call.1} parent=1 // pred_region
      _
    $region21: #{tpu_custom_call.1} parent=1 // pred_fallthru
      _
    // Predicated region
    $region22: #{tpu_custom_call.1} parent=1 // pred_check
      _
    $region23: #{tpu_custom_call.1} parent=1 // pred_check_branch
      %52 = sbr.rel (0) target = $region25
    $region24: #{tpu_custom_call.1} parent=1 // pred_region
      %53 = dma.done [#allocation3], 32
    $region25: #{tpu_custom_call.1} parent=1 // pred_fallthru
      _
    // Predicated region
    $region26: #{tpu_custom_call.1} parent=1 // pred_check
      _
    $region27: #{tpu_custom_call.1} parent=1 // pred_check_branch
      %55 = sbr.rel (0) target = $region29
    $region28: #{tpu_custom_call.1} parent=1 // pred_region
      %56 = dma.done [#allocation6], 512
    $region29: #{tpu_custom_call.1} parent=1 // pred_fallthru
      _
    // Predicated region
    $region30: #{tpu_custom_call.1} parent=1 // pred_check
      _
    $region31: #{tpu_custom_call.1} parent=1 // pred_check_branch
      %58 = sbr.rel (0) target = $region33
    $region32: #{tpu_custom_call.1} parent=1 // pred_region
      %59 = dma.done [#allocation6], 512
    $region33: #{tpu_custom_call.1} parent=1 // pred_fallthru
      _
    %v60 = vld [vmem:[#allocation2] sm:$0x3]
    %v61 = vld [vmem:[#allocation5] sm:$0xff]
    %v62 = vld [vmem:[#allocation5 + $0x8] sm:$0xff]
    %v63 = vld [vmem:[#allocation5 + $0x10] sm:$0xff]
    %v64 = vld [vmem:[#allocation5 + $0x18] sm:$0xff]
    %v65 = vld [vmem:[%s2] sm:$0x1]
    %v67 = vlaneseq
    %v68 = vshrl.u32 %v67, 7
    %v69 = vsub.s32 0, %v68
    %v70 = vrot.slane %v65, %v69
    %vm72 = vcmask 261120
    %v74 = vsel %vm72, %v60, 0
    %76 = vmatprep.subr.mxu0 0.0
    %77 = vmatpush1.msra.mxu0 %v61
    %78 = vmatprep.subr.mxu0 0.0
    %79 = vmatpush1.msra.mxu0 %v62
    %80 = vmatprep.subr.mxu0 0.0
    %81 = vmatpush1.msra.mxu0 %v63
    %82 = vmatprep.subr.mxu0 0.0
    %83 = vmatpush1.msra.mxu0 %v64
    %84 = vmatprep.subr.mxu0 0.0
    %85 = vmatpush1.msra.mxu0 0.0
    %86 = vmatprep.subr.mxu0 0.0
    %87 = vmatpush1.msra.mxu0 0.0
    %88 = vmatprep.subr.mxu0 0.0
    %89 = vmatpush1.msra.mxu0 0.0
    %90 = vmatprep.subr.mxu0 0.0
    %91 = vmatpush1.msra.mxu0 0.0
    %92 = vmatprep.subr.mxu0 0.0
    %93 = vmatpush1.msra.mxu0 0.0
    %94 = vmatprep.subr.mxu0 0.0
    %95 = vmatpush1.msra.mxu0 0.0
    %96 = vmatprep.subr.mxu0 0.0
    %97 = vmatpush1.msra.mxu0 0.0
    %98 = vmatprep.subr.mxu0 0.0
    %99 = vmatpush1.msra.mxu0 0.0
    %100 = vmatprep.subr.mxu0 0.0
    %101 = vmatpush1.msra.mxu0 0.0
    %102 = vmatprep.subr.mxu0 0.0
    %103 = vmatpush1.msra.mxu0 0.0
    %104 = vmatprep.subr.mxu0 0.0
    %105 = vmatpush1.msra.mxu0 0.0
    %106 = vmatprep.subr.mxu0 0.0
    %107 = vmatpush1.msra.mxu0 0.0
    %108 = vmatprep.subr.mxu0 0.0
    %109 = vmatpush1.msra.mxu0 0.0
    %110 = vmatprep.subr.mxu0 0.0
    %111 = vmatpush1.msra.mxu0 0.0
    %112 = vmatprep.subr.mxu0 0.0
    %113 = vmatpush1.msra.mxu0 0.0
    %114 = vmatprep.subr.mxu0 0.0
    %115 = vmatpush1.msra.mxu0 0.0
    %116 = vmatprep.subr.mxu0 0.0
    %117 = vmatpush1.msra.mxu0 0.0
    %118 = vmatprep.subr.mxu0 0.0
    %119 = vmatpush1.msra.mxu0 0.0
    %120 = vmatprep.subr.mxu0 0.0
    %121 = vmatpush1.msra.mxu0 0.0
    %122 = vmatprep.subr.mxu0 0.0
    %123 = vmatpush1.msra.mxu0 0.0
    %124 = vmatprep.subr.mxu0 0.0
    %125 = vmatpush1.msra.mxu0 0.0
    %126 = vmatprep.subr.mxu0 0.0
    %127 = vmatpush1.msra.mxu0 0.0
    %128 = vmatprep.subr.mxu0 0.0
    %129 = vmatpush1.msra.mxu0 0.0
    %130 = vmatprep.subr.mxu0 0.0
    %131 = vmatpush1.msra.mxu0 0.0
    %132 = vmatprep.subr.mxu0 0.0
    %133 = vmatpush1.msra.mxu0 0.0
    %134 = vmatprep.subr.mxu0 0.0
    %135 = vmatpush1.msra.mxu0 0.0
    %136 = vmatprep.subr.mxu0 0.0
    %137 = vmatpush1.msra.mxu0 0.0
    %138 = vmatprep.subr.mxu0 0.0
    %139 = vmatpush1.msra.mxu0 0.0
    %140 = vmatprep.mubr.f32.mxu0 0.0
    %141 = vmatmul.mubr.f32.gmra.mrb[0].mxu0 %v74
    %v142 = vpop.f32.mrb[0].mxu0
    %v143 = vadd.f32 %v70, %v142
    %v144 = vpop.f32.mrb[0].mxu0
    %145 = vdwg.mxu0
    %v146 = vmul.f32 %v143, 0.5
    %v147 = vmul.f32 %v143, 0.70710677
    %v148 = verf.f32.pop %v147
    %v149 = vadd.f32 %v148, 1.0
    %v150 = vmul.f32 %v146, %v149
    %v151 = vld [vmem:[#allocation7] sm:$0xff]
    %v152 = vld [vmem:[#allocation7 + $0x8] sm:$0xff]
    %v153 = vld [vmem:[#allocation7 + $0x10] sm:$0xff]
    %v154 = vld [vmem:[#allocation7 + $0x18] sm:$0xff]
    %v155 = vld [vmem:[%s4] sm:$0x1]
    %v157 = vlaneseq
    %v158 = vshrl.u32 %v157, 7
    %v159 = vsub.s32 0, %v158
    %v160 = vrot.slane %v155, %v159
    %v163 = vsel %vm72, %v150, 0
    %165 = vmatprep.subr.mxu0 0.0
    %166 = vmatpush1.msra.mxu0 %v151
    %167 = vmatprep.subr.mxu0 0.0
    %168 = vmatpush1.msra.mxu0 %v152
    %169 = vmatprep.subr.mxu0 0.0
    %170 = vmatpush1.msra.mxu0 %v153
    %171 = vmatprep.subr.mxu0 0.0
    %172 = vmatpush1.msra.mxu0 %v154
    %173 = vmatprep.subr.mxu0 0.0
    %174 = vmatpush1.msra.mxu0 0.0
    %175 = vmatprep.subr.mxu0 0.0
    %176 = vmatpush1.msra.mxu0 0.0
    %177 = vmatprep.subr.mxu0 0.0
    %178 = vmatpush1.msra.mxu0 0.0
    %179 = vmatprep.subr.mxu0 0.0
    %180 = vmatpush1.msra.mxu0 0.0
    %181 = vmatprep.subr.mxu0 0.0
    %182 = vmatpush1.msra.mxu0 0.0
    %183 = vmatprep.subr.mxu0 0.0
    %184 = vmatpush1.msra.mxu0 0.0
    %185 = vmatprep.subr.mxu0 0.0
    %186 = vmatpush1.msra.mxu0 0.0
    %187 = vmatprep.subr.mxu0 0.0
    %188 = vmatpush1.msra.mxu0 0.0
    %189 = vmatprep.subr.mxu0 0.0
    %190 = vmatpush1.msra.mxu0 0.0
    %191 = vmatprep.subr.mxu0 0.0
    %192 = vmatpush1.msra.mxu0 0.0
    %193 = vmatprep.subr.mxu0 0.0
    %194 = vmatpush1.msra.mxu0 0.0
    %195 = vmatprep.subr.mxu0 0.0
    %196 = vmatpush1.msra.mxu0 0.0
    %197 = vmatprep.subr.mxu0 0.0
    %198 = vmatpush1.msra.mxu0 0.0
    %199 = vmatprep.subr.mxu0 0.0
    %200 = vmatpush1.msra.mxu0 0.0
    %201 = vmatprep.subr.mxu0 0.0
    %202 = vmatpush1.msra.mxu0 0.0
    %203 = vmatprep.subr.mxu0 0.0
    %204 = vmatpush1.msra.mxu0 0.0
    %205 = vmatprep.subr.mxu0 0.0
    %206 = vmatpush1.msra.mxu0 0.0
    %207 = vmatprep.subr.mxu0 0.0
    %208 = vmatpush1.msra.mxu0 0.0
    %209 = vmatprep.subr.mxu0 0.0
    %210 = vmatpush1.msra.mxu0 0.0
    %211 = vmatprep.subr.mxu0 0.0
    %212 = vmatpush1.msra.mxu0 0.0
    %213 = vmatprep.subr.mxu0 0.0
    %214 = vmatpush1.msra.mxu0 0.0
    %215 = vmatprep.subr.mxu0 0.0
    %216 = vmatpush1.msra.mxu0 0.0
    %217 = vmatprep.subr.mxu0 0.0
    %218 = vmatpush1.msra.mxu0 0.0
    %219 = vmatprep.subr.mxu0 0.0
    %220 = vmatpush1.msra.mxu0 0.0
    %221 = vmatprep.subr.mxu0 0.0
    %222 = vmatpush1.msra.mxu0 0.0
    %223 = vmatprep.subr.mxu0 0.0
    %224 = vmatpush1.msra.mxu0 0.0
    %225 = vmatprep.subr.mxu0 0.0
    %226 = vmatpush1.msra.mxu0 0.0
    %227 = vmatprep.subr.mxu0 0.0
    %228 = vmatpush1.msra.mxu0 0.0
    %229 = vmatprep.mubr.f32.mxu0 0.0
    %230 = vmatmul.mubr.f32.gmra.mrb[0].mxu0 %v163
    %v231 = vpop.f32.mrb[0].mxu0
    %v232 = vadd.f32 %v160, %v231
    %v233 = vpop.f32.mrb[0].mxu0
    %234 = vdwg.mxu0
    %235 = vst [vmem:[#allocation8] sm:$0x3] %v232
    // Predicated region
    $region34: #{tpu_custom_call.1} parent=1 // pred_check
      _
    $region35: #{tpu_custom_call.1} parent=1 // pred_check_branch
      %237 = sbr.rel (0) target = $region37
    $region36: #{tpu_custom_call.1} parent=1 // pred_region
      %s239 = ssub.s32 32, 32
      %240 = vsyncadd [#allocation4], %s239
      %s242 = sshll.u32 [#allocation8], 4
      %s243 = int_to_ptr.vmem [resolvable:$true] %s242
      %245 = dma.vmem_to_hbm [thread:$0]  %s243, 32, %s5, [#allocation4]
    $region37: #{tpu_custom_call.1} parent=1 // pred_fallthru
      _
    // Predicated region
    $region38: #{tpu_custom_call.1} parent=1 // pred_check
      _
    $region39: #{tpu_custom_call.1} parent=1 // pred_check_branch
      %247 = sbr.rel (0) target = $region41
    $region40: #{tpu_custom_call.1} parent=1 // pred_region
      %248 = dma.done [#allocation4], 32
    $region41: #{tpu_custom_call.1} parent=1 // pred_fallthru
      _
    %249 = vsyncpa [#allocation3], 1
    %250 = vsyncpa [#allocation6], 1
    %251 = vsyncpa [#allocation4], 1

</llo_original>
